<compile_context>
chip_gen: v6e
topology: v6e:2x2x1
jax: 0.10.0
libtpu: 0.0.40
codegen_flags: <defaults>
</compile_context>

<pallas_src>
import jax
import jax.numpy as jnp
from jax.experimental import pallas as pl
from jax.experimental.pallas import tpu as pltpu


def _dma_identity_kernel(x_hbm_ref, o_hbm_ref, copy_sem):
    # Whole-array HBM -> HBM DMA.  No VMEM staging, no vld/vst work, no
    # tiling constraints; bound only by HBM read+write bytes.
    cp = pltpu.make_async_copy(x_hbm_ref, o_hbm_ref, copy_sem)
    cp.start()
    cp.wait()


def identity_copy(x):
    """Bit-exact identity copy of `x` via a single Pallas HBM->HBM DMA."""
    if x.ndim == 0 or x.size == 0:
        # Nothing to DMA; identity is already exact.
        return x

    return pl.pallas_call(
        _dma_identity_kernel,
        out_shape=jax.ShapeDtypeStruct(x.shape, x.dtype),
        in_specs=[pl.BlockSpec(memory_space=pl.ANY)],
        out_specs=pl.BlockSpec(memory_space=pl.ANY),
        scratch_shapes=[pltpu.SemaphoreType.DMA(())],
    )(x)


class PrintLayer:
    """JAX/Pallas port of the PyTorch PrintLayer module (no parameters)."""

    def __init__(self, layer_name, msg, is_header=False, dbg_mode=False,
                 use_pallas_copy=False):
        self.is_header = is_header
        self.layer_name = layer_name
        self.msg = msg
        self.dbg_mode = dbg_mode
        # When True, route the value through the Pallas HBM->HBM DMA identity
        # copy (pedagogical / validation path).  Default hot path is a free
        # pass-through — the review's highest-value recommendation.
        self.use_pallas_copy = use_pallas_copy

    def __call__(self, x):
        if self.dbg_mode:
            # Shape is static at trace time, so printing happens host-side,
            # mirroring the PyTorch module's print statements (once per trace
            # under jit rather than once per call — see module docstring).
            if self.is_header:
                print('')
                print('(?)(?)(?)(?)(?)(?)(?)(?)(?)(?)(?) Header '
                      '(?)(?)(?)(?)(?)(?)(?)(?)(?)(?)(?)')
                print(f'(?) {self.layer_name} - {self.msg}\n'
                      f'(?) Data Shape: {x.shape}')
                print('(?)(?)(?)(?)(?)(?)(?)(?)(?)(?)(?)(?)(?)(?)(?)(?)'
                      '(?)(?)(?)(?)(?)(?)(?)(?)(?)')
            else:
                print(f'(?) {self.layer_name} - {self.msg}: {x.shape}')

        if self.use_pallas_copy:
            return identity_copy(x)
        # Hot path: pure identity, zero-cost (no kernel launch, no HBM traffic).
        return x


if __name__ == "__main__":
    key = jax.random.PRNGKey(0)
    # NCHW, small shapes consistent with a conv-net debug layer.
    x = jax.random.normal(key, (2, 4, 16, 16), dtype=jnp.float32)

    # 1) Default hot path: identity with no kernel launch.
    layer_fast = PrintLayer("conv1", "after first conv", dbg_mode=False)
    y_fast = jax.block_until_ready(layer_fast(x))
    assert y_fast.shape == x.shape and y_fast.dtype == x.dtype
    assert bool(jnp.all(y_fast == x))

    # 2) Pallas HBM->HBM DMA identity path (runs the kernel once).
    layer_pallas = PrintLayer("conv1", "after first conv", dbg_mode=False,
                              use_pallas_copy=True)
    y = jax.block_until_ready(layer_pallas(x))
    assert y.shape == x.shape and y.dtype == x.dtype
    assert bool(jnp.all(y == x))

    # 3) Ragged element count — no pad/slice needed with the DMA copy.
    x_ragged = jax.random.normal(jax.random.PRNGKey(0), (3, 5, 7),
                                 dtype=jnp.float32)
    y_ragged = jax.block_until_ready(identity_copy(x_ragged))
    assert y_ragged.shape == x_ragged.shape
    assert bool(jnp.all(y_ragged == x_ragged))

    # 4) Sub-32-bit dtype — DMA copy has no sublane-pack block constraints.
    x_bf16 = jax.random.normal(jax.random.PRNGKey(0), (2, 4, 16, 16),
                               dtype=jnp.bfloat16)
    y_bf16 = jax.block_until_ready(identity_copy(x_bf16))
    assert y_bf16.dtype == jnp.bfloat16
    assert bool(jnp.all(y_bf16 == x_bf16))

    # 5) Moderately larger array, still small (512 KiB).
    x_big = jax.random.normal(jax.random.PRNGKey(0), (2, 8, 64, 128),
                              dtype=jnp.float32)
    y_big = jax.block_until_ready(identity_copy(x_big))
    assert bool(jnp.all(y_big == x_big))

    print("KERNEL_OK")
</pallas_src>

<mosaic_0001>
module attributes {stable_mosaic.version = 11 : i64} {
  func.func @_dma_identity_kernel(%arg0: memref<2x4x16x16xf32, #tpu.memory_space<any>>, %arg1: memref<2x4x16x16xf32, #tpu.memory_space<any>>, %arg2: memref<!tpu.dma_semaphore, #tpu.memory_space<semaphore_mem>>) attributes {dimension_semantics = [], scalar_prefetch = 0 : i64, scratch_operands = 1 : i64, tpu.core_type = #tpu.core_type<tc>} {
    tpu.enqueue_dma source(%arg0 : memref<2x4x16x16xf32, #tpu.memory_space<any>>) target(%arg1 : memref<2x4x16x16xf32, #tpu.memory_space<any>>) target_semaphore(%arg2 : memref<!tpu.dma_semaphore, #tpu.memory_space<semaphore_mem>>)
    tpu.wait_dma2 semaphore(%arg2 : memref<!tpu.dma_semaphore, #tpu.memory_space<semaphore_mem>>) src(%arg0 : memref<2x4x16x16xf32, #tpu.memory_space<any>>) dst(%arg1 : memref<2x4x16x16xf32, #tpu.memory_space<any>>)
    return
  }
}

</mosaic_0001>

<llo_original>
// kernel: tpu_custom_call.1
$region0: #{tpu_custom_call.1}
  #allocation0 [shape = 'u32[]', space=smem, size = 0x4, offset = 0x4, fixed_abs, tag = 'smem constant byte address 0x4 - core index']
  #allocation1 [shape = 'u32[144,128]{1,0:T(1,128)}', space=vmem, size = 0x12000, scoped, tag = 'internal scratch']
  #allocation2 [shape = 's32[1]{0}', space=sflag, size = 0x4, scoped, tag = 'scratch operand']
  #allocation3 [shape = 's32[]', space=sflag, size = 0x4, offset = 0, fixed_abs, tag = 'sflag constant byte address 0x0 - dummy sync flag']
  #allocation4 [shape = 'u32[0]{0}', space=smem, size = 0, offset = 0, fixed_abs, tag = 'smem constant byte address 0x0 - null']
  %s0 = inlined_call_operand.hbm [shape: f32[2,4,16,16], index: 0, kind: input, shape index: {}]
  %s1 = inlined_call_operand.hbm [shape: f32[2,4,16,16], index: 1, kind: output, shape index: {}]
  %s2 = sld [smem:[#allocation0]]
  $region2: #{tpu_custom_call.1} parent=0
    _
  %s4 = ssub.s32 1, %s2
  %s5 = scalar_select 0, %s4, %s2
  %s7 = sshll.u32 1, 14
  %s8 = sxor.u32 4294967295, %s7
  %12 = dma.general %s0, 2048, %s1, [#allocation2], 131072, [#allocation4], 0, 0
  %s13 = smul.u32 2, 4
  %s14 = smul.u32 %s13, 16
  %s15 = smul.u32 %s14, 1
  %s16 = sshll.u32 %s15, 4
  %17 = dma.done [#allocation2], %s16
  %18 = vsyncmov [#allocation2]
  %s19 = vpop.sfrf %18
  %p20 = scmp.eq.s32.totalorder %s19, 0
  %p21 = pneg %p20
  %23 = shalt.err (%p21)

</llo_original>
